<compile_context>
chip_gen: v6e
topology: v6e:2x2x1
jax: 0.10.0
libtpu: 0.0.40
codegen_flags: <defaults>
</compile_context>

<pallas_src>
import functools

import numpy as np
import jax
import jax.numpy as jnp
from jax import lax
from jax.experimental import pallas as pl
from jax.experimental.pallas import tpu as pltpu

EPS = 1e-08
_SUBLANE = 8
_LANE = 128
# Per-streamed-buffer VMEM byte budget (x-tile columns + coords-tile columns).
_TILE_BYTE_BUDGET = 8 * 1024 * 1024


def _round_up(a, b):
    return (a + b - 1) // b * b


def _cdiv(a, b):
    return (a + b - 1) // b


def _spatial_mean_kernel(x_ref, coords_ref, o_ref, acc_ref, *,
                         k_dims, n_true, n_rem, eps):
    # x_ref:      (tm, tn)  input tile, native dtype (cast to f32 in VMEM)
    # coords_ref: (8,  tn)  f32; rows 0..K-1 = coordinates, row K = ones
    # o_ref:      (tm, 8)   f32 output (cols 0..K-1 = mean coords, col K = power)
    # acc_ref:    (tm, 8)   f32 scratch accumulator
    k = pl.program_id(1)
    k_last = pl.num_programs(1) - 1

    @pl.when(k == 0)
    def _():
        acc_ref[...] = jnp.zeros_like(acc_ref)

    def accumulate(xabs):
        # Single skinny MXU contraction: (tm, tn) x (tn, 8) -> (tm, 8).
        # Column j (< K) is sum_n |x|*coord_j[n]; column K is sum_n |x|.
        acc_ref[...] += lax.dot_general(
            xabs, coords_ref[...],
            dimension_numbers=(((1,), (1,)), ((), ())),
            preferred_element_type=jnp.float32,
            precision=lax.Precision.HIGHEST)

    if n_rem == 0:
        accumulate(jnp.abs(x_ref[...].astype(jnp.float32)))
    else:
        # Ragged last N tile: mask garbage lanes with a select (not a multiply).
        @pl.when(k != k_last)
        def _():
            accumulate(jnp.abs(x_ref[...].astype(jnp.float32)))

        @pl.when(k == k_last)
        def _():
            xabs = jnp.abs(x_ref[...].astype(jnp.float32))
            col = lax.broadcasted_iota(jnp.int32, xabs.shape, 1)
            accumulate(jnp.where(col < n_rem, xabs, 0.0))

    @pl.when(k == k_last)
    def _():
        acc = acc_ref[...]
        # sum(|x| + eps) over the true N  ==  sum(|x|) + N * eps
        den = acc[:, k_dims:k_dims + 1] + jnp.float32(n_true * eps)
        lane = lax.broadcasted_iota(jnp.int32, acc.shape, 1)
        # Divide only coordinate columns; keep column K as the raw power sum.
        o_ref[...] = jnp.where(lane < k_dims, acc / den, acc).astype(o_ref.dtype)


def _make_coords(spatial_shape, k_dims, n_pad, pytorch_order):
    """(8, n_pad) f32: rows 0..K-1 = coords of flat row-major index, row K = ones."""
    grids = np.meshgrid(*[np.arange(s) for s in spatial_shape], indexing="ij")
    coord_list = [g.reshape(-1) for g in grids]            # order (H, W, D, ...)
    if pytorch_order:
        coord_list = coord_list[::-1]                      # -> (D, W, H) for 3-D
    n = coord_list[0].shape[0]
    out = np.zeros((_SUBLANE, n_pad), dtype=np.float32)
    for i, c in enumerate(coord_list):
        out[i, :n] = c
    out[k_dims, :n] = 1.0                                  # ones row -> denominator
    return jnp.asarray(out)


def spatial_mean_chan(x, pytorch_order=True, return_power=False, eps=EPS,
                      tile_m=None, tile_n=None):
    """x: [B, C, *spatial] -> [B, C, len(spatial)] (f32); optionally (+ power)."""
    B, C = int(x.shape[0]), int(x.shape[1])
    spatial = tuple(int(s) for s in x.shape[2:])
    K = len(spatial)
    assert 1 <= K <= _SUBLANE - 1, "supports up to 7 spatial dims"
    N = int(np.prod(spatial))
    M = B * C

    itemsize = int(np.dtype(x.dtype).itemsize)
    row_align = max(_SUBLANE, (_SUBLANE * 4) // itemsize)   # 8 f32 / 16 bf16 / 32 i8

    # ---- tile selection: VMEM-byte-budgeted, no wrapper padding of x ----
    if tile_m is not None:
        tm = _round_up(int(tile_m), row_align)
    else:
        tm = min(_round_up(M, row_align), 256)
    if tile_n is not None:
        tn = _round_up(int(tile_n), _LANE)
    else:
        per_col_bytes = tm * itemsize + _SUBLANE * 4        # x column + coords column
        tn = max(_LANE, (_TILE_BYTE_BUDGET // per_col_bytes) // _LANE * _LANE)
    tn = min(tn, _round_up(N, _LANE))

    m_blocks = _cdiv(M, tm)
    n_steps = _cdiv(N, tn)
    m_pad = m_blocks * tm
    n_pad = n_steps * tn
    n_rem = N % tn                       # 0 => last N tile is full (no masking)

    x_flat = x.reshape(M, N)             # metadata-only reshape; no HBM copy/pad
    coords = _make_coords(spatial, K, n_pad, pytorch_order)  # (8, n_pad) f32

    kernel = functools.partial(_spatial_mean_kernel, k_dims=K, n_true=N,
                               n_rem=n_rem, eps=eps)

    out = pl.pallas_call(
        kernel,
        out_shape=jax.ShapeDtypeStruct((m_pad, _SUBLANE), jnp.float32),
        grid_spec=pltpu.PrefetchScalarGridSpec(
            num_scalar_prefetch=0,
            grid=(m_blocks, n_steps),            # rows first (parallel), N last
            in_specs=[
                pl.BlockSpec((tm, tn), lambda i, k: (i, k)),
                pl.BlockSpec((_SUBLANE, tn), lambda i, k: (0, k)),
            ],
            out_specs=pl.BlockSpec((tm, _SUBLANE), lambda i, k: (i, 0)),
            scratch_shapes=[pltpu.VMEM((tm, _SUBLANE), jnp.float32)],
        ),
        compiler_params=pltpu.CompilerParams(
            dimension_semantics=("parallel", "arbitrary"),
            vmem_limit_bytes=32 * 1024 * 1024,
        ),
    )(x_flat, coords)

    means = out[:M, :K].reshape(B, C, K)
    if return_power:
        power = out[:M, K:K + 1].reshape(B, C, 1)
        return means, power
    return means


def _reference(x_np, pytorch_order=True):
    """Pure-numpy (f64) replica of the PyTorch forward for verification."""
    B, C = x_np.shape[0], x_np.shape[1]
    spatial = x_np.shape[2:]
    N = int(np.prod(spatial))
    x_flat = np.abs(x_np.reshape(B, C, N)).astype(np.float64)
    grids = np.meshgrid(*[np.arange(s) for s in spatial], indexing="ij")
    coord_list = [g.reshape(-1) for g in grids]
    if pytorch_order:
        coord_list = coord_list[::-1]
    coords = np.stack(coord_list, axis=0).astype(np.float64)  # (K, N)
    num = np.einsum("bcn,kn->bck", x_flat, coords)
    den = np.sum(x_flat + EPS, axis=-1, keepdims=True)
    return num / den


if __name__ == "__main__":
    key = jax.random.PRNGKey(0)
    k1, k2, k3, k4 = jax.random.split(key, 4)

    # Case 1: canonical 5-D input [B, C, H, W, D]; single tile, exact sizes.
    x1 = jax.random.normal(k1, (2, 4, 8, 8, 8), dtype=jnp.float32)
    out1 = jax.block_until_ready(spatial_mean_chan(x1))
    np.testing.assert_allclose(np.asarray(out1), _reference(np.asarray(x1)),
                               rtol=1e-4, atol=1e-4)
    assert out1.shape == (2, 4, 3)

    # Case 2: multi-step N reduction with ragged tail (3840 % 1024 = 768) and
    # ragged rows (M=6 in an 8-row block); also checks return_power.
    x2 = jax.random.normal(k2, (2, 3, 12, 16, 20), dtype=jnp.float32)
    out2, pow2 = jax.block_until_ready(
        spatial_mean_chan(x2, return_power=True, tile_n=1024))
    np.testing.assert_allclose(np.asarray(out2), _reference(np.asarray(x2)),
                               rtol=1e-4, atol=1e-4)
    pow_ref = np.abs(np.asarray(x2, np.float64)).reshape(2, 3, -1).sum(
        -1, keepdims=True)
    np.testing.assert_allclose(np.asarray(pow2), pow_ref, rtol=1e-4, atol=1e-4)
    assert out2.shape == (2, 3, 3) and pow2.shape == (2, 3, 1)

    # Case 3: 2-D spatial, single ragged N tile (N=240 inside tn=256), ragged rows.
    x3 = jax.random.normal(k3, (3, 5, 10, 24), dtype=jnp.float32)
    out3 = jax.block_until_ready(spatial_mean_chan(x3))
    np.testing.assert_allclose(np.asarray(out3), _reference(np.asarray(x3)),
                               rtol=1e-4, atol=1e-4)
    assert out3.shape == (3, 5, 2)

    # Case 4: multiple row blocks + multiple N steps, both ragged.
    x4 = jax.random.normal(k4, (4, 5, 6, 7, 8), dtype=jnp.float32)
    out4 = jax.block_until_ready(spatial_mean_chan(x4, tile_m=8, tile_n=128))
    np.testing.assert_allclose(np.asarray(out4), _reference(np.asarray(x4)),
                               rtol=1e-4, atol=1e-4)
    assert out4.shape == (4, 5, 3)

    print("KERNEL_OK")
</pallas_src>

<mosaic_0001>
module attributes {stable_mosaic.version = 11 : i64} {
  func.func @_spatial_mean_kernel(%arg0: i32, %arg1: i32, %arg2: memref<8x512xf32, #tpu.memory_space<vmem>>, %arg3: memref<8x512xf32, #tpu.memory_space<vmem>>, %arg4: memref<8x8xf32, #tpu.memory_space<vmem>>, %arg5: memref<8x8xf32, #tpu.memory_space<vmem>>) attributes {dimension_semantics = [#tpu.dimension_semantics<parallel>, #tpu.dimension_semantics<arbitrary>], iteration_bounds = array<i64: 1, 1>, scalar_prefetch = 0 : i64, scratch_operands = 1 : i64, tpu.core_type = #tpu.core_type<tc>, window_params = [{transform_indices = @transform_0, window_bounds = array<i64: 8, 512>}, {transform_indices = @transform_1, window_bounds = array<i64: 8, 512>}, {transform_indices = @transform_2, window_bounds = array<i64: 8, 8>}]} {
    %c0_i32 = arith.constant 0 : i32
    %0 = arith.cmpi eq, %arg1, %c0_i32 : i32
    %1 = arith.extui %0 : i1 to i32
    %c0_i32_0 = arith.constant 0 : i32
    %2 = arith.cmpi ne, %1, %c0_i32_0 : i32
    scf.if %2 {
      %cst_10 = arith.constant 0.000000e+00 : f32
      %13 = vector.broadcast %cst_10 : f32 to vector<8x8xf32>
      %c0_11 = arith.constant 0 : index
      %c0_12 = arith.constant 0 : index
      %14 = vector.load %arg5[%c0_11, %c0_12] : memref<8x8xf32, #tpu.memory_space<vmem>>, vector<8x8xf32>
      tpu.vector_store %arg5[%c0_11, %c0_12], %13 {strides = array<i32>} : memref<8x8xf32, #tpu.memory_space<vmem>>, vector<8x8xf32>,
    } else {
    }
    %c0 = arith.constant 0 : index
    %c0_1 = arith.constant 0 : index
    %3 = vector.load %arg2[%c0, %c0_1] : memref<8x512xf32, #tpu.memory_space<vmem>>, vector<8x512xf32>
    %4 = math.absf %3 : vector<8x512xf32>
    %c0_2 = arith.constant 0 : index
    %c0_3 = arith.constant 0 : index
    %5 = vector.load %arg5[%c0_2, %c0_3] : memref<8x8xf32, #tpu.memory_space<vmem>>, vector<8x8xf32>
    %c0_4 = arith.constant 0 : index
    %c0_5 = arith.constant 0 : index
    %6 = vector.load %arg3[%c0_4, %c0_5] : memref<8x512xf32, #tpu.memory_space<vmem>>, vector<8x512xf32>
    %cst = arith.constant dense<0.000000e+00> : vector<8x8xf32>
    %7 = tpu.matmul %4, %6, %cst {dimension_numbers = #tpu.dot_dimension_numbers<[1], [1], [0], [0], [0, 0, 1, 0], [], []>, precision = #tpu.contract_precision<fp32>} : vector<8x512xf32>, vector<8x512xf32>, vector<8x8xf32> -> vector<8x8xf32>
    %8 = arith.addf %5, %7 : vector<8x8xf32>
    %c0_6 = arith.constant 0 : index
    %c0_7 = arith.constant 0 : index
    %9 = vector.load %arg5[%c0_6, %c0_7] : memref<8x8xf32, #tpu.memory_space<vmem>>, vector<8x8xf32>
    tpu.vector_store %arg5[%c0_6, %c0_7], %8 {strides = array<i32>} : memref<8x8xf32, #tpu.memory_space<vmem>>, vector<8x8xf32>,
    %c0_i32_8 = arith.constant 0 : i32
    %10 = arith.cmpi eq, %arg1, %c0_i32_8 : i32
    %11 = arith.extui %10 : i1 to i32
    %c0_i32_9 = arith.constant 0 : i32
    %12 = arith.cmpi ne, %11, %c0_i32_9 : i32
    scf.if %12 {
      %c0_10 = arith.constant 0 : index
      %c0_11 = arith.constant 0 : index
      %13 = vector.load %arg5[%c0_10, %c0_11] : memref<8x8xf32, #tpu.memory_space<vmem>>, vector<8x8xf32>
      %14 = vector.extract_strided_slice %13 {offsets = [0, 3], sizes = [8, 1], strides = [1, 1]} : vector<8x8xf32> to vector<8x1xf32>
      %cst_12 = arith.constant 5.120000e-06 : f32
      %15 = vector.broadcast %cst_12 : f32 to vector<8x1xf32>
      %16 = arith.addf %14, %15 : vector<8x1xf32>
      %17 = tpu.iota {dimensions = array<i32: 1>} : vector<8x8xi32>
      %c3_i32 = arith.constant 3 : i32
      %18 = vector.broadcast %c3_i32 : i32 to vector<8x8xi32>
      %19 = arith.cmpi slt, %17, %18 : vector<8x8xi32>
      %20 = vector.broadcast %16 : vector<8x1xf32> to vector<8x8xf32>
      %21 = arith.divf %13, %20 : vector<8x8xf32>
      %22 = arith.select %19, %21, %13 : vector<8x8xi1>, vector<8x8xf32>
      %c0_13 = arith.constant 0 : index
      %c0_14 = arith.constant 0 : index
      %23 = vector.load %arg4[%c0_13, %c0_14] : memref<8x8xf32, #tpu.memory_space<vmem>>, vector<8x8xf32>
      tpu.vector_store %arg4[%c0_13, %c0_14], %22 {strides = array<i32>} : memref<8x8xf32, #tpu.memory_space<vmem>>, vector<8x8xf32>,
    } else {
    }
    return
  }
  func.func @transform_0(%arg0: i32, %arg1: i32) -> (i32, i32) {
    %c0_i32 = arith.constant 0 : i32
    return %arg0, %arg1 : i32, i32
  }
  func.func @transform_1(%arg0: i32, %arg1: i32) -> (i32, i32) {
    %c0_i32 = arith.constant 0 : i32
    %c0_i32_0 = arith.constant 0 : i32
    return %c0_i32, %arg1 : i32, i32
  }
  func.func @transform_2(%arg0: i32, %arg1: i32) -> (i32, i32) {
    %c0_i32 = arith.constant 0 : i32
    %c0_i32_0 = arith.constant 0 : i32
    return %arg0, %c0_i32 : i32, i32
  }
}

</mosaic_0001>

<llo_original>
// kernel: tpu_custom_call.1
$region0: #{tpu_custom_call.1}
  #allocation0 [shape = 'u32[]', space=smem, size = 0x4, offset = 0x4, fixed_abs, tag = 'smem constant byte address 0x4 - core index']
  #allocation1 [shape = 'u32[144,128]{1,0:T(1,128)}', space=vmem, size = 0x12000, scoped, tag = 'internal scratch']
  #allocation2 [shape = 'f32[8,8]{1,0:T(8,128)}', space=vmem, size = 0x1000, scoped, tag = 'scratch operand']
  %s0 = inlined_call_operand.hbm [shape: f32[8,512], index: 0, kind: input, shape index: {}]
  %s1 = inlined_call_operand.hbm [shape: f32[8,512], index: 1, kind: input, shape index: {}]
  %s2 = inlined_call_operand.hbm [shape: f32[8,8], index: 2, kind: output, shape index: {}]
  %s3 = sld [smem:[#allocation0]]
  $region34: #{tpu_custom_call.1} parent=0
    _
  %s5 = ssub.s32 1, %s3
  %s6 = scalar_select 0, %s5, %s3
  $region1: #{tpu_custom_call.1} parent=0
    #allocation3 [shape = 'u8[16384]{0}', space=vmem, size = 0x4000, scoped, tag = 'input window, operand 0, single buffered']
    #allocation4 [shape = 's32[1]{0}', space=sflag, size = 0x4, scoped, tag = 'scoped memory for tpu_custom_call.1']
    #allocation5 [shape = 's32[1]{0}', space=sflag, size = 0x4, scoped, tag = 'scoped memory for tpu_custom_call.1']
    #allocation6 [shape = 'u8[16384]{0}', space=vmem, size = 0x4000, scoped, tag = 'input window, operand 1, single buffered']
    #allocation7 [shape = 's32[1]{0}', space=sflag, size = 0x4, scoped, tag = 'scoped memory for tpu_custom_call.1']
    #allocation8 [shape = 'u8[4096]{0}', space=vmem, size = 0x1000, scoped, tag = 'output window, operand 0, single buffered']
    %7 = vsyncpa [#allocation4], 0
    %8 = vsyncpa [#allocation7], 0
    %9 = vsyncpa [#allocation5], 0
    // Predicated region
    $region2: #{tpu_custom_call.1} parent=1 // pred_check
      _
    $region3: #{tpu_custom_call.1} parent=1 // pred_check_branch
      %11 = sbr.rel (0) target = $region5
    $region4: #{tpu_custom_call.1} parent=1 // pred_region
      %s13 = ssub.s32 512, 512
      %14 = vsyncadd [#allocation4], %s13
      %s16 = sshll.u32 [#allocation3], 4
      %s17 = int_to_ptr.vmem [resolvable:$true] %s16
      %19 = dma.hbm_to_vmem [thread:$0]  %s0, 512, %s17, [#allocation4]
    $region5: #{tpu_custom_call.1} parent=1 // pred_fallthru
      _
    // Predicated region
    $region6: #{tpu_custom_call.1} parent=1 // pred_check
      _
    $region7: #{tpu_custom_call.1} parent=1 // pred_check_branch
      %21 = sbr.rel (0) target = $region9
    $region8: #{tpu_custom_call.1} parent=1 // pred_region
      %s23 = ssub.s32 512, 512
      %24 = vsyncadd [#allocation7], %s23
      %s26 = sshll.u32 [#allocation6], 4
      %s27 = int_to_ptr.vmem [resolvable:$true] %s26
      %29 = dma.hbm_to_vmem [thread:$0]  %s1, 512, %s27, [#allocation7]
    $region9: #{tpu_custom_call.1} parent=1 // pred_fallthru
      _
    // Predicated region
    $region10: #{tpu_custom_call.1} parent=1 // pred_check
      _
    $region11: #{tpu_custom_call.1} parent=1 // pred_check_branch
      %31 = sbr.rel (0) target = $region13
    $region12: #{tpu_custom_call.1} parent=1 // pred_region
      %32 = dma.done [#allocation4], 512
    $region13: #{tpu_custom_call.1} parent=1 // pred_fallthru
      _
    // Predicated region
    $region14: #{tpu_custom_call.1} parent=1 // pred_check
      _
    $region15: #{tpu_custom_call.1} parent=1 // pred_check_branch
      %34 = sbr.rel (0) target = $region17
    $region16: #{tpu_custom_call.1} parent=1 // pred_region
      %35 = dma.done [#allocation7], 512
    $region17: #{tpu_custom_call.1} parent=1 // pred_fallthru
      _
    %p36 = scmp.eq.s32.totalorder 0, 0
    // Predicated region
    $region18: #{tpu_custom_call.1} parent=1 // pred_check
      %p37 = pneg %p36
    $region19: #{tpu_custom_call.1} parent=1 // pred_check_branch
      %39 = sbr.rel (%p37) target = $region21
    $region20: #{tpu_custom_call.1} parent=1 // pred_region
      %vm40 = vcmask 64512
      %41 = vst.msk [vmem:[#allocation2] sm:$0xff] %vm40, 0.0
    $region21: #{tpu_custom_call.1} parent=1 // pred_fallthru
      _
    %v42 = vld [vmem:[#allocation3] sm:$0xff]
    %v43 = vld [vmem:[#allocation3 + $0x8] sm:$0xff]
    %v44 = vld [vmem:[#allocation3 + $0x10] sm:$0xff]
    %v45 = vld [vmem:[#allocation3 + $0x18] sm:$0xff]
    %v46 = vand.u32 2147483647, %v42
    %v47 = vand.u32 2147483647, %v43
    %v48 = vand.u32 2147483647, %v44
    %v49 = vand.u32 2147483647, %v45
    %v50 = vld [vmem:[#allocation2] sm:$0xff]
    %v51 = vld [vmem:[#allocation6] sm:$0xff]
    %v52 = vld [vmem:[#allocation6 + $0x8] sm:$0xff]
    %v53 = vld [vmem:[#allocation6 + $0x10] sm:$0xff]
    %v54 = vld [vmem:[#allocation6 + $0x18] sm:$0xff]
    %55 = vmatprep.subr.mxu0 0.0
    %56 = vmatpush1.xpose.msra.mxu0 0.0
    %57 = vmatprep.subr.mxu0 0.0
    %58 = vmatpush1.xpose.msra.mxu0 0.0
    %59 = vmatprep.subr.mxu0 0.0
    %60 = vmatpush1.xpose.msra.mxu0 0.0
    %61 = vmatprep.subr.mxu0 0.0
    %62 = vmatpush1.xpose.msra.mxu0 0.0
    %63 = vmatprep.subr.mxu0 0.0
    %64 = vmatpush1.xpose.msra.mxu0 0.0
    %65 = vmatprep.subr.mxu0 0.0
    %66 = vmatpush1.xpose.msra.mxu0 0.0
    %67 = vmatprep.subr.mxu0 0.0
    %68 = vmatpush1.xpose.msra.mxu0 0.0
    %69 = vmatprep.subr.mxu0 0.0
    %70 = vmatpush1.xpose.msra.mxu0 0.0
    %71 = vmatprep.subr.mxu0 0.0
    %72 = vmatpush1.xpose.msra.mxu0 0.0
    %73 = vmatprep.subr.mxu0 0.0
    %74 = vmatpush1.xpose.msra.mxu0 0.0
    %75 = vmatprep.subr.mxu0 0.0
    %76 = vmatpush1.xpose.msra.mxu0 0.0
    %77 = vmatprep.subr.mxu0 0.0
    %78 = vmatpush1.xpose.msra.mxu0 0.0
    %79 = vmatprep.subr.mxu0 0.0
    %80 = vmatpush1.xpose.msra.mxu0 0.0
    %81 = vmatprep.subr.mxu0 0.0
    %82 = vmatpush1.xpose.msra.mxu0 0.0
    %83 = vmatprep.subr.mxu0 0.0
    %84 = vmatpush1.xpose.msra.mxu0 0.0
    %v85 = vand.u32 %v52, 4294901760
    %86 = vmatprep.subr.mxu0 %v85
    %v87 = vand.u32 %v51, 4294901760
    %88 = vmatpush1.xpose.msra.mxu0 %v87
    %89 = vmatprep.subr.mxu0 0.0
    %90 = vmatpush2.xpose.msra.mxu0 0.0
    %91 = vmatprep.subr.mxu0 0.0
    %92 = vmatpush2.xpose.msra.mxu0 0.0
    %93 = vmatprep.subr.mxu0 0.0
    %94 = vmatpush2.xpose.msra.mxu0 0.0
    %95 = vmatprep.subr.mxu0 0.0
    %96 = vmatpush2.xpose.msra.mxu0 0.0
    %97 = vmatprep.subr.mxu0 0.0
    %98 = vmatpush2.xpose.msra.mxu0 0.0
    %99 = vmatprep.subr.mxu0 0.0
    %100 = vmatpush2.xpose.msra.mxu0 0.0
    %101 = vmatprep.subr.mxu0 0.0
    %102 = vmatpush2.xpose.msra.mxu0 0.0
    %103 = vmatprep.subr.mxu0 0.0
    %104 = vmatpush2.xpose.msra.mxu0 0.0
    %105 = vmatprep.subr.mxu0 0.0
    %106 = vmatpush2.xpose.msra.mxu0 0.0
    %107 = vmatprep.subr.mxu0 0.0
    %108 = vmatpush2.xpose.msra.mxu0 0.0
    %109 = vmatprep.subr.mxu0 0.0
    %110 = vmatpush2.xpose.msra.mxu0 0.0
    %111 = vmatprep.subr.mxu0 0.0
    %112 = vmatpush2.xpose.msra.mxu0 0.0
    %113 = vmatprep.subr.mxu0 0.0
    %114 = vmatpush2.xpose.msra.mxu0 0.0
    %115 = vmatprep.subr.mxu0 0.0
    %116 = vmatpush2.xpose.msra.mxu0 0.0
    %117 = vmatprep.subr.mxu0 0.0
    %118 = vmatpush2.xpose.msra.mxu0 0.0
    %119 = vmatprep.subr.mxu0 0.0
    %120 = vmatpush2.xpose.msra.mxu0 0.0
    %v121 = vand.u32 %v47, 4294901760
    %v122 = vsub.f32 %v47, %v121
    %v123 = vand.u32 %v122, 4294901760
    %v124 = vsub.f32 %v122, %v123
    %v125 = vand.u32 %v124, 4294901760
    %126 = vmatprep.mubr.f32.mxu0 %v125
    %v127 = vand.u32 %v46, 4294901760
    %v128 = vsub.f32 %v46, %v127
    %v129 = vand.u32 %v128, 4294901760
    %v130 = vsub.f32 %v128, %v129
    %v131 = vand.u32 %v130, 4294901760
    %132 = vmatmul.mubr.f32.gmra.mxu0 %v131
    %v133 = vpop.f32.mrf.mxu0
    %v134 = vadd.f32 0.0, %v133
    %v135 = vpop.f32.mrf.mxu0
    %136 = vdwg.mxu0
    %137 = vmatprep.subr.mxu0 0.0
    %138 = vmatpush1.xpose.msra.mxu0 0.0
    %139 = vmatprep.subr.mxu0 0.0
    %140 = vmatpush1.xpose.msra.mxu0 0.0
    %141 = vmatprep.subr.mxu0 0.0
    %142 = vmatpush1.xpose.msra.mxu0 0.0
    %143 = vmatprep.subr.mxu0 0.0
    %144 = vmatpush1.xpose.msra.mxu0 0.0
    %145 = vmatprep.subr.mxu0 0.0
    %146 = vmatpush1.xpose.msra.mxu0 0.0
    %147 = vmatprep.subr.mxu0 0.0
    %148 = vmatpush1.xpose.msra.mxu0 0.0
    %149 = vmatprep.subr.mxu0 0.0
    %150 = vmatpush1.xpose.msra.mxu0 0.0
    %151 = vmatprep.subr.mxu0 0.0
    %152 = vmatpush1.xpose.msra.mxu0 0.0
    %153 = vmatprep.subr.mxu0 0.0
    %154 = vmatpush1.xpose.msra.mxu0 0.0
    %155 = vmatprep.subr.mxu0 0.0
    %156 = vmatpush1.xpose.msra.mxu0 0.0
    %157 = vmatprep.subr.mxu0 0.0
    %158 = vmatpush1.xpose.msra.mxu0 0.0
    %159 = vmatprep.subr.mxu0 0.0
    %160 = vmatpush1.xpose.msra.mxu0 0.0
    %161 = vmatprep.subr.mxu0 0.0
    %162 = vmatpush1.xpose.msra.mxu0 0.0
    %163 = vmatprep.subr.mxu0 0.0
    %164 = vmatpush1.xpose.msra.mxu0 0.0
    %165 = vmatprep.subr.mxu0 0.0
    %166 = vmatpush1.xpose.msra.mxu0 0.0
    %v167 = vand.u32 %v52, 4294901760
    %v168 = vsub.f32 %v52, %v167
    %v169 = vand.u32 %v168, 4294901760
    %v170 = vsub.f32 %v168, %v169
    %v171 = vand.u32 %v170, 4294901760
    %172 = vmatprep.subr.mxu0 %v171
    %v173 = vand.u32 %v51, 4294901760
    %v174 = vsub.f32 %v51, %v173
    %v175 = vand.u32 %v174, 4294901760
    %v176 = vsub.f32 %v174, %v175
    %v177 = vand.u32 %v176, 4294901760
    %178 = vmatpush1.xpose.msra.mxu0 %v177
    %179 = vmatprep.subr.mxu0 0.0
    %180 = vmatpush2.xpose.msra.mxu0 0.0
    %181 = vmatprep.subr.mxu0 0.0
    %182 = vmatpush2.xpose.msra.mxu0 0.0
    %183 = vmatprep.subr.mxu0 0.0
    %184 = vmatpush2.xpose.msra.mxu0 0.0
    %185 = vmatprep.subr.mxu0 0.0
    %186 = vmatpush2.xpose.msra.mxu0 0.0
    %187 = vmatprep.subr.mxu0 0.0
    %188 = vmatpush2.xpose.msra.mxu0 0.0
    %189 = vmatprep.subr.mxu0 0.0
    %190 = vmatpush2.xpose.msra.mxu0 0.0
    %191 = vmatprep.subr.mxu0 0.0
    %192 = vmatpush2.xpose.msra.mxu0 0.0
    %193 = vmatprep.subr.mxu0 0.0
    %194 = vmatpush2.xpose.msra.mxu0 0.0
    %195 = vmatprep.subr.mxu0 0.0
    %196 = vmatpush2.xpose.msra.mxu0 0.0
    %197 = vmatprep.subr.mxu0 0.0
    %198 = vmatpush2.xpose.msra.mxu0 0.0
    %199 = vmatprep.subr.mxu0 0.0
    %200 = vmatpush2.xpose.msra.mxu0 0.0
    %201 = vmatprep.subr.mxu0 0.0
    %202 = vmatpush2.xpose.msra.mxu0 0.0
    %203 = vmatprep.subr.mxu0 0.0
    %204 = vmatpush2.xpose.msra.mxu0 0.0
    %205 = vmatprep.subr.mxu0 0.0
    %206 = vmatpush2.xpose.msra.mxu0 0.0
    %207 = vmatprep.subr.mxu0 0.0
    %208 = vmatpush2.xpose.msra.mxu0 0.0
    %209 = vmatprep.subr.mxu0 0.0
    %210 = vmatpush2.xpose.msra.mxu0 0.0
    %v211 = vand.u32 %v47, 4294901760
    %212 = vmatprep.mubr.f32.mxu0 %v211
    %v213 = vand.u32 %v46, 4294901760
    %214 = vmatmul.mubr.f32.gmra.mxu0 %v213
    %v215 = vpop.f32.mrf.mxu0
    %v216 = vadd.f32 %v134, %v215
    %v217 = vpop.f32.mrf.mxu0
    %218 = vdwg.mxu0
    %219 = vmatprep.subr.mxu0 0.0
    %220 = vmatpush1.xpose.msra.mxu0 0.0
    %221 = vmatprep.subr.mxu0 0.0
    %222 = vmatpush1.xpose.msra.mxu0 0.0
    %223 = vmatprep.subr.mxu0 0.0
    %224 = vmatpush1.xpose.msra.mxu0 0.0
    %225 = vmatprep.subr.mxu0 0.0
    %226 = vmatpush1.xpose.msra.mxu0 0.0
    %227 = vmatprep.subr.mxu0 0.0
    %228 = vmatpush1.xpose.msra.mxu0 0.0
    %229 = vmatprep.subr.mxu0 0.0
    %230 = vmatpush1.xpose.msra.mxu0 0.0
    %231 = vmatprep.subr.mxu0 0.0
    %232 = vmatpush1.xpose.msra.mxu0 0.0
    %233 = vmatprep.subr.mxu0 0.0
    %234 = vmatpush1.xpose.msra.mxu0 0.0
    %235 = vmatprep.subr.mxu0 0.0
    %236 = vmatpush1.xpose.msra.mxu0 0.0
    %237 = vmatprep.subr.mxu0 0.0
    %238 = vmatpush1.xpose.msra.mxu0 0.0
    %239 = vmatprep.subr.mxu0 0.0
    %240 = vmatpush1.xpose.msra.mxu0 0.0
    %241 = vmatprep.subr.mxu0 0.0
    %242 = vmatpush1.xpose.msra.mxu0 0.0
    %243 = vmatprep.subr.mxu0 0.0
    %244 = vmatpush1.xpose.msra.mxu0 0.0
    %245 = vmatprep.subr.mxu0 0.0
    %246 = vmatpush1.xpose.msra.mxu0 0.0
    %247 = vmatprep.subr.mxu0 0.0
    %248 = vmatpush1.xpose.msra.mxu0 0.0
    %v249 = vand.u32 %v52, 4294901760
    %v250 = vsub.f32 %v52, %v249
    %251 = vmatprep.subr.mxu0 %v250
    %v252 = vand.u32 %v51, 4294901760
    %v253 = vsub.f32 %v51, %v252
    %254 = vmatpush1.xpose.msra.mxu0 %v253
    %255 = vmatprep.subr.mxu0 0.0
    %256 = vmatpush2.xpose.msra.mxu0 0.0
    %257 = vmatprep.subr.mxu0 0.0
    %258 = vmatpush2.xpose.msra.mxu0 0.0
    %259 = vmatprep.subr.mxu0 0.0
    %260 = vmatpush2.xpose.msra.mxu0 0.0
    %261 = vmatprep.subr.mxu0 0.0
    %262 = vmatpush2.xpose.msra.mxu0 0.0
    %263 = vmatprep.subr.mxu0 0.0
    %264 = vmatpush2.xpose.msra.mxu0 0.0
    %265 = vmatprep.subr.mxu0 0.0
    %266 = vmatpush2.xpose.msra.mxu0 0.0
    %267 = vmatprep.subr.mxu0 0.0
    %268 = vmatpush2.xpose.msra.mxu0 0.0
    %269 = vmatprep.subr.mxu0 0.0
    %270 = vmatpush2.xpose.msra.mxu0 0.0
    %271 = vmatprep.subr.mxu0 0.0
    %272 = vmatpush2.xpose.msra.mxu0 0.0
    %273 = vmatprep.subr.mxu0 0.0
    %274 = vmatpush2.xpose.msra.mxu0 0.0
    %275 = vmatprep.subr.mxu0 0.0
    %276 = vmatpush2.xpose.msra.mxu0 0.0
    %277 = vmatprep.subr.mxu0 0.0
    %278 = vmatpush2.xpose.msra.mxu0 0.0
    %279 = vmatprep.subr.mxu0 0.0
    %280 = vmatpush2.xpose.msra.mxu0 0.0
    %281 = vmatprep.subr.mxu0 0.0
    %282 = vmatpush2.xpose.msra.mxu0 0.0
    %283 = vmatprep.subr.mxu0 0.0
    %284 = vmatpush2.xpose.msra.mxu0 0.0
    %285 = vmatprep.subr.mxu0 0.0
    %286 = vmatpush2.xpose.msra.mxu0 0.0
    %v287 = vand.u32 %v47, 4294901760
    %v288 = vsub.f32 %v47, %v287
    %289 = vmatprep.mubr.f32.mxu0 %v288
    %v290 = vand.u32 %v46, 4294901760
    %v291 = vsub.f32 %v46, %v290
    %292 = vmatmul.mubr.f32.gmra.mxu0 %v291
    %v293 = vpop.f32.mrf.mxu0
    %v294 = vadd.f32 %v216, %v293
    %v295 = vpop.f32.mrf.mxu0
    %296 = vdwg.mxu0
    %297 = vmatprep.subr.mxu0 0.0
    %298 = vmatpush1.xpose.msra.mxu0 0.0
    %299 = vmatprep.subr.mxu0 0.0
    %300 = vmatpush1.xpose.msra.mxu0 0.0
    %301 = vmatprep.subr.mxu0 0.0
    %302 = vmatpush1.xpose.msra.mxu0 0.0
    %303 = vmatprep.subr.mxu0 0.0
    %304 = vmatpush1.xpose.msra.mxu0 0.0
    %305 = vmatprep.subr.mxu0 0.0
    %306 = vmatpush1.xpose.msra.mxu0 0.0
    %307 = vmatprep.subr.mxu0 0.0
    %308 = vmatpush1.xpose.msra.mxu0 0.0
    %309 = vmatprep.subr.mxu0 0.0
    %310 = vmatpush1.xpose.msra.mxu0 0.0
    %311 = vmatprep.subr.mxu0 0.0
    %312 = vmatpush1.xpose.msra.mxu0 0.0
    %313 = vmatprep.subr.mxu0 0.0
    %314 = vmatpush1.xpose.msra.mxu0 0.0
    %315 = vmatprep.subr.mxu0 0.0
    %316 = vmatpush1.xpose.msra.mxu0 0.0
    %317 = vmatprep.subr.mxu0 0.0
    %318 = vmatpush1.xpose.msra.mxu0 0.0
    %319 = vmatprep.subr.mxu0 0.0
    %320 = vmatpush1.xpose.msra.mxu0 0.0
    %321 = vmatprep.subr.mxu0 0.0
    %322 = vmatpush1.xpose.msra.mxu0 0.0
    %323 = vmatprep.subr.mxu0 0.0
    %324 = vmatpush1.xpose.msra.mxu0 0.0
    %325 = vmatprep.subr.mxu0 0.0
    %326 = vmatpush1.xpose.msra.mxu0 0.0
    %v327 = vand.u32 %v52, 4294901760
    %328 = vmatprep.subr.mxu0 %v327
    %v329 = vand.u32 %v51, 4294901760
    %330 = vmatpush1.xpose.msra.mxu0 %v329
    %331 = vmatprep.subr.mxu0 0.0
    %332 = vmatpush2.xpose.msra.mxu0 0.0
    %333 = vmatprep.subr.mxu0 0.0
    %334 = vmatpush2.xpose.msra.mxu0 0.0
    %335 = vmatprep.subr.mxu0 0.0
    %336 = vmatpush2.xpose.msra.mxu0 0.0
    %337 = vmatprep.subr.mxu0 0.0
    %338 = vmatpush2.xpose.msra.mxu0 0.0
    %339 = vmatprep.subr.mxu0 0.0
    %340 = vmatpush2.xpose.msra.mxu0 0.0
    %341 = vmatprep.subr.mxu0 0.0
    %342 = vmatpush2.xpose.msra.mxu0 0.0
    %343 = vmatprep.subr.mxu0 0.0
    %344 = vmatpush2.xpose.msra.mxu0 0.0
    %345 = vmatprep.subr.mxu0 0.0
    %346 = vmatpush2.xpose.msra.mxu0 0.0
    %347 = vmatprep.subr.mxu0 0.0
    %348 = vmatpush2.xpose.msra.mxu0 0.0
    %349 = vmatprep.subr.mxu0 0.0
    %350 = vmatpush2.xpose.msra.mxu0 0.0
    %351 = vmatprep.subr.mxu0 0.0
    %352 = vmatpush2.xpose.msra.mxu0 0.0
    %353 = vmatprep.subr.mxu0 0.0
    %354 = vmatpush2.xpose.msra.mxu0 0.0
    %355 = vmatprep.subr.mxu0 0.0
    %356 = vmatpush2.xpose.msra.mxu0 0.0
    %357 = vmatprep.subr.mxu0 0.0
    %358 = vmatpush2.xpose.msra.mxu0 0.0
    %359 = vmatprep.subr.mxu0 0.0
    %360 = vmatpush2.xpose.msra.mxu0 0.0
    %361 = vmatprep.subr.mxu0 0.0
    %362 = vmatpush2.xpose.msra.mxu0 0.0
    %v363 = vand.u32 %v47, 4294901760
    %v364 = vsub.f32 %v47, %v363
    %v365 = vand.u32 %v364, 4294901760
    %366 = vmatprep.mubr.f32.mxu0 %v365
    %v367 = vand.u32 %v46, 4294901760
    %v368 = vsub.f32 %v46, %v367
    %v369 = vand.u32 %v368, 4294901760
    %370 = vmatmul.mubr.f32.gmra.mxu0 %v369
    %v371 = vpop.f32.mrf.mxu0
    %v372 = vadd.f32 %v294, %v371
    %v373 = vpop.f32.mrf.mxu0
    %374 = vdwg.mxu0
    %375 = vmatprep.subr.mxu0 0.0
    %376 = vmatpush1.xpose.msra.mxu0 0.0
    %377 = vmatprep.subr.mxu0 0.0
    %378 = vmatpush1.xpose.msra.mxu0 0.0
    %379 = vmatprep.subr.mxu0 0.0
    %380 = vmatpush1.xpose.msra.mxu0 0.0
    %381 = vmatprep.subr.mxu0 0.0
    %382 = vmatpush1.xpose.msra.mxu0 0.0
    %383 = vmatprep.subr.mxu0 0.0
    %384 = vmatpush1.xpose.msra.mxu0 0.0
    %385 = vmatprep.subr.mxu0 0.0
    %386 = vmatpush1.xpose.msra.mxu0 0.0
    %387 = vmatprep.subr.mxu0 0.0
    %388 = vmatpush1.xpose.msra.mxu0 0.0
    %389 = vmatprep.subr.mxu0 0.0
    %390 = vmatpush1.xpose.msra.mxu0 0.0
    %391 = vmatprep.subr.mxu0 0.0
    %392 = vmatpush1.xpose.msra.mxu0 0.0
    %393 = vmatprep.subr.mxu0 0.0
    %394 = vmatpush1.xpose.msra.mxu0 0.0
    %395 = vmatprep.subr.mxu0 0.0
    %396 = vmatpush1.xpose.msra.mxu0 0.0
    %397 = vmatprep.subr.mxu0 0.0
    %398 = vmatpush1.xpose.msra.mxu0 0.0
    %399 = vmatprep.subr.mxu0 0.0
    %400 = vmatpush1.xpose.msra.mxu0 0.0
    %401 = vmatprep.subr.mxu0 0.0
    %402 = vmatpush1.xpose.msra.mxu0 0.0
    %403 = vmatprep.subr.mxu0 0.0
    %404 = vmatpush1.xpose.msra.mxu0 0.0
    %v405 = vand.u32 %v52, 4294901760
    %v406 = vsub.f32 %v52, %v405
    %v407 = vand.u32 %v406, 4294901760
    %408 = vmatprep.subr.mxu0 %v407
    %v409 = vand.u32 %v51, 4294901760
    %v410 = vsub.f32 %v51, %v409
    %v411 = vand.u32 %v410, 4294901760
    %412 = vmatpush1.xpose.msra.mxu0 %v411
    %413 = vmatprep.subr.mxu0 0.0
    %414 = vmatpush2.xpose.msra.mxu0 0.0
    %415 = vmatprep.subr.mxu0 0.0
    %416 = vmatpush2.xpose.msra.mxu0 0.0
    %417 = vmatprep.subr.mxu0 0.0
    %418 = vmatpush2.xpose.msra.mxu0 0.0
    %419 = vmatprep.subr.mxu0 0.0
    %420 = vmatpush2.xpose.msra.mxu0 0.0
    %421 = vmatprep.subr.mxu0 0.0
    %422 = vmatpush2.xpose.msra.mxu0 0.0
    %423 = vmatprep.subr.mxu0 0.0
    %424 = vmatpush2.xpose.msra.mxu0 0.0
    %425 = vmatprep.subr.mxu0 0.0
    %426 = vmatpush2.xpose.msra.mxu0 0.0
    %427 = vmatprep.subr.mxu0 0.0
    %428 = vmatpush2.xpose.msra.mxu0 0.0
    %429 = vmatprep.subr.mxu0 0.0
    %430 = vmatpush2.xpose.msra.mxu0 0.0
    %431 = vmatprep.subr.mxu0 0.0
    %432 = vmatpush2.xpose.msra.mxu0 0.0
    %433 = vmatprep.subr.mxu0 0.0
    %434 = vmatpush2.xpose.msra.mxu0 0.0
    %435 = vmatprep.subr.mxu0 0.0
    %436 = vmatpush2.xpose.msra.mxu0 0.0
    %437 = vmatprep.subr.mxu0 0.0
    %438 = vmatpush2.xpose.msra.mxu0 0.0
    %439 = vmatprep.subr.mxu0 0.0
    %440 = vmatpush2.xpose.msra.mxu0 0.0
    %441 = vmatprep.subr.mxu0 0.0
    %442 = vmatpush2.xpose.msra.mxu0 0.0
    %443 = vmatprep.subr.mxu0 0.0
    %444 = vmatpush2.xpose.msra.mxu0 0.0
    %v445 = vand.u32 %v47, 4294901760
    %446 = vmatprep.mubr.f32.mxu0 %v445
    %v447 = vand.u32 %v46, 4294901760
    %448 = vmatmul.mubr.f32.gmra.mxu0 %v447
    %v449 = vpop.f32.mrf.mxu0
    %v450 = vadd.f32 %v372, %v449
    %v451 = vpop.f32.mrf.mxu0
    %452 = vdwg.mxu0
    %453 = vmatprep.subr.mxu0 0.0
    %454 = vmatpush1.xpose.msra.mxu0 0.0
    %455 = vmatprep.subr.mxu0 0.0
    %456 = vmatpush1.xpose.msra.mxu0 0.0
    %457 = vmatprep.subr.mxu0 0.0
    %458 = vmatpush1.xpose.msra.mxu0 0.0
    %459 = vmatprep.subr.mxu0 0.0
    %460 = vmatpush1.xpose.msra.mxu0 0.0
    %461 = vmatprep.subr.mxu0 0.0
    %462 = vmatpush1.xpose.msra.mxu0 0.0
    %463 = vmatprep.subr.mxu0 0.0
    %464 = vmatpush1.xpose.msra.mxu0 0.0
    %465 = vmatprep.subr.mxu0 0.0
    %466 = vmatpush1.xpose.msra.mxu0 0.0
    %467 = vmatprep.subr.mxu0 0.0
    %468 = vmatpush1.xpose.msra.mxu0 0.0
    %469 = vmatprep.subr.mxu0 0.0
    %470 = vmatpush1.xpose.msra.mxu0 0.0
    %471 = vmatprep.subr.mxu0 0.0
    %472 = vmatpush1.xpose.msra.mxu0 0.0
    %473 = vmatprep.subr.mxu0 0.0
    %474 = vmatpush1.xpose.msra.mxu0 0.0
    %475 = vmatprep.subr.mxu0 0.0
    %476 = vmatpush1.xpose.msra.mxu0 0.0
    %477 = vmatprep.subr.mxu0 0.0
    %478 = vmatpush1.xpose.msra.mxu0 0.0
    %479 = vmatprep.subr.mxu0 0.0
    %480 = vmatpush1.xpose.msra.mxu0 0.0
    %481 = vmatprep.subr.mxu0 0.0
    %482 = vmatpush1.xpose.msra.mxu0 0.0
    %v483 = vand.u32 %v52, 4294901760
    %484 = vmatprep.subr.mxu0 %v483
    %v485 = vand.u32 %v51, 4294901760
    %486 = vmatpush1.xpose.msra.mxu0 %v485
    %487 = vmatprep.subr.mxu0 0.0
    %488 = vmatpush2.xpose.msra.mxu0 0.0
    %489 = vmatprep.subr.mxu0 0.0
    %490 = vmatpush2.xpose.msra.mxu0 0.0
    %491 = vmatprep.subr.mxu0 0.0
    %492 = vmatpush2.xpose.msra.mxu0 0.0
    %493 = vmatprep.subr.mxu0 0.0
    %494 = vmatpush2.xpose.msra.mxu0 0.0
    %495 = vmatprep.subr.mxu0 0.0
    %496 = vmatpush2.xpose.msra.mxu0 0.0
    %497 = vmatprep.subr.mxu0 0.0
    %498 = vmatpush2.xpose.msra.mxu0 0.0
    %499 = vmatprep.subr.mxu0 0.0
    %500 = vmatpush2.xpose.msra.mxu0 0.0
    %501 = vmatprep.subr.mxu0 0.0
    %502 = vmatpush2.xpose.msra.mxu0 0.0
    %503 = vmatprep.subr.mxu0 0.0
    %504 = vmatpush2.xpose.msra.mxu0 0.0
    %505 = vmatprep.subr.mxu0 0.0
    %506 = vmatpush2.xpose.msra.mxu0 0.0
    %507 = vmatprep.subr.mxu0 0.0
    %508 = vmatpush2.xpose.msra.mxu0 0.0
    %509 = vmatprep.subr.mxu0 0.0
    %510 = vmatpush2.xpose.msra.mxu0 0.0
    %511 = vmatprep.subr.mxu0 0.0
    %512 = vmatpush2.xpose.msra.mxu0 0.0
    %513 = vmatprep.subr.mxu0 0.0
    %514 = vmatpush2.xpose.msra.mxu0 0.0
    %515 = vmatprep.subr.mxu0 0.0
    %516 = vmatpush2.xpose.msra.mxu0 0.0
    %517 = vmatprep.subr.mxu0 0.0
    %518 = vmatpush2.xpose.msra.mxu0 0.0
    %v519 = vand.u32 %v47, 4294901760
    %520 = vmatprep.mubr.f32.mxu0 %v519
    %v521 = vand.u32 %v46, 4294901760
    %522 = vmatmul.mubr.f32.gmra.mxu0 %v521
    %v523 = vpop.f32.mrf.mxu0
    %v524 = vadd.f32 %v450, %v523
    %v525 = vpop.f32.mrf.mxu0
    %526 = vdwg.mxu0
    %527 = vmatprep.subr.mxu0 0.0
    %528 = vmatpush1.xpose.msra.mxu0 0.0
    %529 = vmatprep.subr.mxu0 0.0
    %530 = vmatpush1.xpose.msra.mxu0 0.0
    %531 = vmatprep.subr.mxu0 0.0
    %532 = vmatpush1.xpose.msra.mxu0 0.0
    %533 = vmatprep.subr.mxu0 0.0
    %534 = vmatpush1.xpose.msra.mxu0 0.0
    %535 = vmatprep.subr.mxu0 0.0
    %536 = vmatpush1.xpose.msra.mxu0 0.0
    %537 = vmatprep.subr.mxu0 0.0
    %538 = vmatpush1.xpose.msra.mxu0 0.0
    %539 = vmatprep.subr.mxu0 0.0
    %540 = vmatpush1.xpose.msra.mxu0 0.0
    %541 = vmatprep.subr.mxu0 0.0
    %542 = vmatpush1.xpose.msra.mxu0 0.0
    %543 = vmatprep.subr.mxu0 0.0
    %544 = vmatpush1.xpose.msra.mxu0 0.0
    %545 = vmatprep.subr.mxu0 0.0
    %546 = vmatpush1.xpose.msra.mxu0 0.0
    %547 = vmatprep.subr.mxu0 0.0
    %548 = vmatpush1.xpose.msra.mxu0 0.0
    %549 = vmatprep.subr.mxu0 0.0
    %550 = vmatpush1.xpose.msra.mxu0 0.0
    %551 = vmatprep.subr.mxu0 0.0
    %552 = vmatpush1.xpose.msra.mxu0 0.0
    %553 = vmatprep.subr.mxu0 0.0
    %554 = vmatpush1.xpose.msra.mxu0 0.0
    %555 = vmatprep.subr.mxu0 0.0
    %556 = vmatpush1.xpose.msra.mxu0 0.0
    %v557 = vand.u32 %v54, 4294901760
    %558 = vmatprep.subr.mxu0 %v557
    %v559 = vand.u32 %v53, 4294901760
    %560 = vmatpush1.xpose.msra.mxu0 %v559
    %561 = vmatprep.subr.mxu0 0.0
    %562 = vmatpush2.xpose.msra.mxu0 0.0
    %563 = vmatprep.subr.mxu0 0.0
    %564 = vmatpush2.xpose.msra.mxu0 0.0
    %565 = vmatprep.subr.mxu0 0.0
    %566 = vmatpush2.xpose.msra.mxu0 0.0
    %567 = vmatprep.subr.mxu0 0.0
    %568 = vmatpush2.xpose.msra.mxu0 0.0
    %569 = vmatprep.subr.mxu0 0.0
    %570 = vmatpush2.xpose.msra.mxu0 0.0
    %571 = vmatprep.subr.mxu0 0.0
    %572 = vmatpush2.xpose.msra.mxu0 0.0
    %573 = vmatprep.subr.mxu0 0.0
    %574 = vmatpush2.xpose.msra.mxu0 0.0
    %575 = vmatprep.subr.mxu0 0.0
    %576 = vmatpush2.xpose.msra.mxu0 0.0
    %577 = vmatprep.subr.mxu0 0.0
    %578 = vmatpush2.xpose.msra.mxu0 0.0
    %579 = vmatprep.subr.mxu0 0.0
    %580 = vmatpush2.xpose.msra.mxu0 0.0
    %581 = vmatprep.subr.mxu0 0.0
    %582 = vmatpush2.xpose.msra.mxu0 0.0
    %583 = vmatprep.subr.mxu0 0.0
    %584 = vmatpush2.xpose.msra.mxu0 0.0
    %585 = vmatprep.subr.mxu0 0.0
    %586 = vmatpush2.xpose.msra.mxu0 0.0
    %587 = vmatprep.subr.mxu0 0.0
    %588 = vmatpush2.xpose.msra.mxu0 0.0
    %589 = vmatprep.subr.mxu0 0.0
    %590 = vmatpush2.xpose.msra.mxu0 0.0
    %591 = vmatprep.subr.mxu0 0.0
    %592 = vmatpush2.xpose.msra.mxu0 0.0
    %v593 = vand.u32 %v49, 4294901760
    %v594 = vsub.f32 %v49, %v593
    %v595 = vand.u32 %v594, 4294901760
    %v596 = vsub.f32 %v594, %v595
    %v597 = vand.u32 %v596, 4294901760
    %598 = vmatprep.mubr.f32.mxu0 %v597
    %v599 = vand.u32 %v48, 4294901760
    %v600 = vsub.f32 %v48, %v599
    %v601 = vand.u32 %v600, 4294901760
    %v602 = vsub.f32 %v600, %v601
    %v603 = vand.u32 %v602, 4294901760
    %604 = vmatmul.mubr.f32.gmra.mxu0 %v603
    %v605 = vpop.f32.mrf.mxu0
    %v606 = vadd.f32 %v524, %v605
    %v607 = vpop.f32.mrf.mxu0
    %608 = vdwg.mxu0
    %609 = vmatprep.subr.mxu0 0.0
    %610 = vmatpush1.xpose.msra.mxu0 0.0
    %611 = vmatprep.subr.mxu0 0.0
    %612 = vmatpush1.xpose.msra.mxu0 0.0
    %613 = vmatprep.subr.mxu0 0.0
    %614 = vmatpush1.xpose.msra.mxu0 0.0
    %615 = vmatprep.subr.mxu0 0.0
    %616 = vmatpush1.xpose.msra.mxu0 0.0
    %617 = vmatprep.subr.mxu0 0.0
    %618 = vmatpush1.xpose.msra.mxu0 0.0
    %619 = vmatprep.subr.mxu0 0.0
    %620 = vmatpush1.xpose.msra.mxu0 0.0
    %621 = vmatprep.subr.mxu0 0.0
    %622 = vmatpush1.xpose.msra.mxu0 0.0
    %623 = vmatprep.subr.mxu0 0.0
    %624 = vmatpush1.xpose.msra.mxu0 0.0
    %625 = vmatprep.subr.mxu0 0.0
    %626 = vmatpush1.xpose.msra.mxu0 0.0
    %627 = vmatprep.subr.mxu0 0.0
    %628 = vmatpush1.xpose.msra.mxu0 0.0
    %629 = vmatprep.subr.mxu0 0.0
    %630 = vmatpush1.xpose.msra.mxu0 0.0
    %631 = vmatprep.subr.mxu0 0.0
    %632 = vmatpush1.xpose.msra.mxu0 0.0
    %633 = vmatprep.subr.mxu0 0.0
    %634 = vmatpush1.xpose.msra.mxu0 0.0
    %635 = vmatprep.subr.mxu0 0.0
    %636 = vmatpush1.xpose.msra.mxu0 0.0
    %637 = vmatprep.subr.mxu0 0.0
    %638 = vmatpush1.xpose.msra.mxu0 0.0
    %v639 = vand.u32 %v54, 4294901760
    %v640 = vsub.f32 %v54, %v639
    %v641 = vand.u32 %v640, 4294901760
    %v642 = vsub.f32 %v640, %v641
    %v643 = vand.u32 %v642, 4294901760
    %644 = vmatprep.subr.mxu0 %v643
    %v645 = vand.u32 %v53, 4294901760
    %v646 = vsub.f32 %v53, %v645
    %v647 = vand.u32 %v646, 4294901760
    %v648 = vsub.f32 %v646, %v647
    %v649 = vand.u32 %v648, 4294901760
    %650 = vmatpush1.xpose.msra.mxu0 %v649
    %651 = vmatprep.subr.mxu0 0.0
    %652 = vmatpush2.xpose.msra.mxu0 0.0
    %653 = vmatprep.subr.mxu0 0.0
    %654 = vmatpush2.xpose.msra.mxu0 0.0
    %655 = vmatprep.subr.mxu0 0.0
    %656 = vmatpush2.xpose.msra.mxu0 0.0
    %657 = vmatprep.subr.mxu0 0.0
    %658 = vmatpush2.xpose.msra.mxu0 0.0
    %659 = vmatprep.subr.mxu0 0.0
    %660 = vmatpush2.xpose.msra.mxu0 0.0
    %661 = vmatprep.subr.mxu0 0.0
    %662 = vmatpush2.xpose.msra.mxu0 0.0
    %663 = vmatprep.subr.mxu0 0.0
    %664 = vmatpush2.xpose.msra.mxu0 0.0
    %665 = vmatprep.subr.mxu0 0.0
    %666 = vmatpush2.xpose.msra.mxu0 0.0
    %667 = vmatprep.subr.mxu0 0.0
    %668 = vmatpush2.xpose.msra.mxu0 0.0
    %669 = vmatprep.subr.mxu0 0.0
    %670 = vmatpush2.xpose.msra.mxu0 0.0
    %671 = vmatprep.subr.mxu0 0.0
    %672 = vmatpush2.xpose.msra.mxu0 0.0
    %673 = vmatprep.subr.mxu0 0.0
    %674 = vmatpush2.xpose.msra.mxu0 0.0
    %675 = vmatprep.subr.mxu0 0.0
    %676 = vmatpush2.xpose.msra.mxu0 0.0
    %677 = vmatprep.subr.mxu0 0.0
    %678 = vmatpush2.xpose.msra.mxu0 0.0
    %679 = vmatprep.subr.mxu0 0.0
    %680 = vmatpush2.xpose.msra.mxu0 0.0
    %681 = vmatprep.subr.mxu0 0.0
    %682 = vmatpush2.xpose.msra.mxu0 0.0
    %v683 = vand.u32 %v49, 4294901760
    %684 = vmatprep.mubr.f32.mxu0 %v683
    %v685 = vand.u32 %v48, 4294901760
    %686 = vmatmul.mubr.f32.gmra.mxu0 %v685
    %v687 = vpop.f32.mrf.mxu0
    %v688 = vadd.f32 %v606, %v687
    %v689 = vpop.f32.mrf.mxu0
    %690 = vdwg.mxu0
    %691 = vmatprep.subr.mxu0 0.0
    %692 = vmatpush1.xpose.msra.mxu0 0.0
    %693 = vmatprep.subr.mxu0 0.0
    %694 = vmatpush1.xpose.msra.mxu0 0.0
    %695 = vmatprep.subr.mxu0 0.0
    %696 = vmatpush1.xpose.msra.mxu0 0.0
    %697 = vmatprep.subr.mxu0 0.0
    %698 = vmatpush1.xpose.msra.mxu0 0.0
    %699 = vmatprep.subr.mxu0 0.0
    %700 = vmatpush1.xpose.msra.mxu0 0.0
    %701 = vmatprep.subr.mxu0 0.0
    %702 = vmatpush1.xpose.msra.mxu0 0.0
    %703 = vmatprep.subr.mxu0 0.0
    %704 = vmatpush1.xpose.msra.mxu0 0.0
    %705 = vmatprep.subr.mxu0 0.0
    %706 = vmatpush1.xpose.msra.mxu0 0.0
    %707 = vmatprep.subr.mxu0 0.0
    %708 = vmatpush1.xpose.msra.mxu0 0.0
    %709 = vmatprep.subr.mxu0 0.0
    %710 = vmatpush1.xpose.msra.mxu0 0.0
    %711 = vmatprep.subr.mxu0 0.0
    %712 = vmatpush1.xpose.msra.mxu0 0.0
    %713 = vmatprep.subr.mxu0 0.0
    %714 = vmatpush1.xpose.msra.mxu0 0.0
    %715 = vmatprep.subr.mxu0 0.0
    %716 = vmatpush1.xpose.msra.mxu0 0.0
    %717 = vmatprep.subr.mxu0 0.0
    %718 = vmatpush1.xpose.msra.mxu0 0.0
    %719 = vmatprep.subr.mxu0 0.0
    %720 = vmatpush1.xpose.msra.mxu0 0.0
    %v721 = vand.u32 %v54, 4294901760
    %v722 = vsub.f32 %v54, %v721
    %723 = vmatprep.subr.mxu0 %v722
    %v724 = vand.u32 %v53, 4294901760
    %v725 = vsub.f32 %v53, %v724
    %726 = vmatpush1.xpose.msra.mxu0 %v725
    %727 = vmatprep.subr.mxu0 0.0
    %728 = vmatpush2.xpose.msra.mxu0 0.0
    %729 = vmatprep.subr.mxu0 0.0
    %730 = vmatpush2.xpose.msra.mxu0 0.0
    %731 = vmatprep.subr.mxu0 0.0
    %732 = vmatpush2.xpose.msra.mxu0 0.0
    %733 = vmatprep.subr.mxu0 0.0
    %734 = vmatpush2.xpose.msra.mxu0 0.0
    %735 = vmatprep.subr.mxu0 0.0
    %736 = vmatpush2.xpose.msra.mxu0 0.0
    %737 = vmatprep.subr.mxu0 0.0
    %738 = vmatpush2.xpose.msra.mxu0 0.0
    %739 = vmatprep.subr.mxu0 0.0
    %740 = vmatpush2.xpose.msra.mxu0 0.0
    %741 = vmatprep.subr.mxu0 0.0
    %742 = vmatpush2.xpose.msra.mxu0 0.0
    %743 = vmatprep.subr.mxu0 0.0
    %744 = vmatpush2.xpose.msra.mxu0 0.0
    %745 = vmatprep.subr.mxu0 0.0
    %746 = vmatpush2.xpose.msra.mxu0 0.0
    %747 = vmatprep.subr.mxu0 0.0
    %748 = vmatpush2.xpose.msra.mxu0 0.0
    %749 = vmatprep.subr.mxu0 0.0
    %750 = vmatpush2.xpose.msra.mxu0 0.0
    %751 = vmatprep.subr.mxu0 0.0
    %752 = vmatpush2.xpose.msra.mxu0 0.0
    %753 = vmatprep.subr.mxu0 0.0
    %754 = vmatpush2.xpose.msra.mxu0 0.0
    %755 = vmatprep.subr.mxu0 0.0
    %756 = vmatpush2.xpose.msra.mxu0 0.0
    %757 = vmatprep.subr.mxu0 0.0
    %758 = vmatpush2.xpose.msra.mxu0 0.0
    %v759 = vand.u32 %v49, 4294901760
    %v760 = vsub.f32 %v49, %v759
    %761 = vmatprep.mubr.f32.mxu0 %v760
    %v762 = vand.u32 %v48, 4294901760
    %v763 = vsub.f32 %v48, %v762
    %764 = vmatmul.mubr.f32.gmra.mxu0 %v763
    %v765 = vpop.f32.mrf.mxu0
    %v766 = vadd.f32 %v688, %v765
    %v767 = vpop.f32.mrf.mxu0
    %768 = vdwg.mxu0
    %769 = vmatprep.subr.mxu0 0.0
    %770 = vmatpush1.xpose.msra.mxu0 0.0
    %771 = vmatprep.subr.mxu0 0.0
    %772 = vmatpush1.xpose.msra.mxu0 0.0
    %773 = vmatprep.subr.mxu0 0.0
    %774 = vmatpush1.xpose.msra.mxu0 0.0
    %775 = vmatprep.subr.mxu0 0.0
    %776 = vmatpush1.xpose.msra.mxu0 0.0
    %777 = vmatprep.subr.mxu0 0.0
    %778 = vmatpush1.xpose.msra.mxu0 0.0
    %779 = vmatprep.subr.mxu0 0.0
    %780 = vmatpush1.xpose.msra.mxu0 0.0
    %781 = vmatprep.subr.mxu0 0.0
    %782 = vmatpush1.xpose.msra.mxu0 0.0
    %783 = vmatprep.subr.mxu0 0.0
    %784 = vmatpush1.xpose.msra.mxu0 0.0
    %785 = vmatprep.subr.mxu0 0.0
    %786 = vmatpush1.xpose.msra.mxu0 0.0
    %787 = vmatprep.subr.mxu0 0.0
    %788 = vmatpush1.xpose.msra.mxu0 0.0
    %789 = vmatprep.subr.mxu0 0.0
    %790 = vmatpush1.xpose.msra.mxu0 0.0
    %791 = vmatprep.subr.mxu0 0.0
    %792 = vmatpush1.xpose.msra.mxu0 0.0
    %793 = vmatprep.subr.mxu0 0.0
    %794 = vmatpush1.xpose.msra.mxu0 0.0
    %795 = vmatprep.subr.mxu0 0.0
    %796 = vmatpush1.xpose.msra.mxu0 0.0
    %797 = vmatprep.subr.mxu0 0.0
    %798 = vmatpush1.xpose.msra.mxu0 0.0
    %v799 = vand.u32 %v54, 4294901760
    %800 = vmatprep.subr.mxu0 %v799
    %v801 = vand.u32 %v53, 4294901760
    %802 = vmatpush1.xpose.msra.mxu0 %v801
    %803 = vmatprep.subr.mxu0 0.0
    %804 = vmatpush2.xpose.msra.mxu0 0.0
    %805 = vmatprep.subr.mxu0 0.0
    %806 = vmatpush2.xpose.msra.mxu0 0.0
    %807 = vmatprep.subr.mxu0 0.0
    %808 = vmatpush2.xpose.msra.mxu0 0.0
    %809 = vmatprep.subr.mxu0 0.0
    %810 = vmatpush2.xpose.msra.mxu0 0.0
    %811 = vmatprep.subr.mxu0 0.0
    %812 = vmatpush2.xpose.msra.mxu0 0.0
    %813 = vmatprep.subr.mxu0 0.0
    %814 = vmatpush2.xpose.msra.mxu0 0.0
    %815 = vmatprep.subr.mxu0 0.0
    %816 = vmatpush2.xpose.msra.mxu0 0.0
    %817 = vmatprep.subr.mxu0 0.0
    %818 = vmatpush2.xpose.msra.mxu0 0.0
    %819 = vmatprep.subr.mxu0 0.0
    %820 = vmatpush2.xpose.msra.mxu0 0.0
    %821 = vmatprep.subr.mxu0 0.0
    %822 = vmatpush2.xpose.msra.mxu0 0.0
    %823 = vmatprep.subr.mxu0 0.0
    %824 = vmatpush2.xpose.msra.mxu0 0.0
    %825 = vmatprep.subr.mxu0 0.0
    %826 = vmatpush2.xpose.msra.mxu0 0.0
    %827 = vmatprep.subr.mxu0 0.0
    %828 = vmatpush2.xpose.msra.mxu0 0.0
    %829 = vmatprep.subr.mxu0 0.0
    %830 = vmatpush2.xpose.msra.mxu0 0.0
    %831 = vmatprep.subr.mxu0 0.0
    %832 = vmatpush2.xpose.msra.mxu0 0.0
    %833 = vmatprep.subr.mxu0 0.0
    %834 = vmatpush2.xpose.msra.mxu0 0.0
    %v835 = vand.u32 %v49, 4294901760
    %v836 = vsub.f32 %v49, %v835
    %v837 = vand.u32 %v836, 4294901760
    %838 = vmatprep.mubr.f32.mxu0 %v837
    %v839 = vand.u32 %v48, 4294901760
    %v840 = vsub.f32 %v48, %v839
    %v841 = vand.u32 %v840, 4294901760
    %842 = vmatmul.mubr.f32.gmra.mxu0 %v841
    %v843 = vpop.f32.mrf.mxu0
    %v844 = vadd.f32 %v766, %v843
    %v845 = vpop.f32.mrf.mxu0
    %846 = vdwg.mxu0
    %847 = vmatprep.subr.mxu0 0.0
    %848 = vmatpush1.xpose.msra.mxu0 0.0
    %849 = vmatprep.subr.mxu0 0.0
    %850 = vmatpush1.xpose.msra.mxu0 0.0
    %851 = vmatprep.subr.mxu0 0.0
    %852 = vmatpush1.xpose.msra.mxu0 0.0
    %853 = vmatprep.subr.mxu0 0.0
    %854 = vmatpush1.xpose.msra.mxu0 0.0
    %855 = vmatprep.subr.mxu0 0.0
    %856 = vmatpush1.xpose.msra.mxu0 0.0
    %857 = vmatprep.subr.mxu0 0.0
    %858 = vmatpush1.xpose.msra.mxu0 0.0
    %859 = vmatprep.subr.mxu0 0.0
    %860 = vmatpush1.xpose.msra.mxu0 0.0
    %861 = vmatprep.subr.mxu0 0.0
    %862 = vmatpush1.xpose.msra.mxu0 0.0
    %863 = vmatprep.subr.mxu0 0.0
    %864 = vmatpush1.xpose.msra.mxu0 0.0
    %865 = vmatprep.subr.mxu0 0.0
    %866 = vmatpush1.xpose.msra.mxu0 0.0
    %867 = vmatprep.subr.mxu0 0.0
    %868 = vmatpush1.xpose.msra.mxu0 0.0
    %869 = vmatprep.subr.mxu0 0.0
    %870 = vmatpush1.xpose.msra.mxu0 0.0
    %871 = vmatprep.subr.mxu0 0.0
    %872 = vmatpush1.xpose.msra.mxu0 0.0
    %873 = vmatprep.subr.mxu0 0.0
    %874 = vmatpush1.xpose.msra.mxu0 0.0
    %875 = vmatprep.subr.mxu0 0.0
    %876 = vmatpush1.xpose.msra.mxu0 0.0
    %v877 = vand.u32 %v54, 4294901760
    %v878 = vsub.f32 %v54, %v877
    %v879 = vand.u32 %v878, 4294901760
    %880 = vmatprep.subr.mxu0 %v879
    %v881 = vand.u32 %v53, 4294901760
    %v882 = vsub.f32 %v53, %v881
    %v883 = vand.u32 %v882, 4294901760
    %884 = vmatpush1.xpose.msra.mxu0 %v883
    %885 = vmatprep.subr.mxu0 0.0
    %886 = vmatpush2.xpose.msra.mxu0 0.0
    %887 = vmatprep.subr.mxu0 0.0
    %888 = vmatpush2.xpose.msra.mxu0 0.0
    %889 = vmatprep.subr.mxu0 0.0
    %890 = vmatpush2.xpose.msra.mxu0 0.0
    %891 = vmatprep.subr.mxu0 0.0
    %892 = vmatpush2.xpose.msra.mxu0 0.0
    %893 = vmatprep.subr.mxu0 0.0
    %894 = vmatpush2.xpose.msra.mxu0 0.0
    %895 = vmatprep.subr.mxu0 0.0
    %896 = vmatpush2.xpose.msra.mxu0 0.0
    %897 = vmatprep.subr.mxu0 0.0
    %898 = vmatpush2.xpose.msra.mxu0 0.0
    %899 = vmatprep.subr.mxu0 0.0
    %900 = vmatpush2.xpose.msra.mxu0 0.0
    %901 = vmatprep.subr.mxu0 0.0
    %902 = vmatpush2.xpose.msra.mxu0 0.0
    %903 = vmatprep.subr.mxu0 0.0
    %904 = vmatpush2.xpose.msra.mxu0 0.0
    %905 = vmatprep.subr.mxu0 0.0
    %906 = vmatpush2.xpose.msra.mxu0 0.0
    %907 = vmatprep.subr.mxu0 0.0
    %908 = vmatpush2.xpose.msra.mxu0 0.0
    %909 = vmatprep.subr.mxu0 0.0
    %910 = vmatpush2.xpose.msra.mxu0 0.0
    %911 = vmatprep.subr.mxu0 0.0
    %912 = vmatpush2.xpose.msra.mxu0 0.0
    %913 = vmatprep.subr.mxu0 0.0
    %914 = vmatpush2.xpose.msra.mxu0 0.0
    %915 = vmatprep.subr.mxu0 0.0
    %916 = vmatpush2.xpose.msra.mxu0 0.0
    %v917 = vand.u32 %v49, 4294901760
    %918 = vmatprep.mubr.f32.mxu0 %v917
    %v919 = vand.u32 %v48, 4294901760
    %920 = vmatmul.mubr.f32.gmra.mxu0 %v919
    %v921 = vpop.f32.mrf.mxu0
    %v922 = vadd.f32 %v844, %v921
    %v923 = vpop.f32.mrf.mxu0
    %924 = vdwg.mxu0
    %925 = vmatprep.subr.mxu0 0.0
    %926 = vmatpush1.xpose.msra.mxu0 0.0
    %927 = vmatprep.subr.mxu0 0.0
    %928 = vmatpush1.xpose.msra.mxu0 0.0
    %929 = vmatprep.subr.mxu0 0.0
    %930 = vmatpush1.xpose.msra.mxu0 0.0
    %931 = vmatprep.subr.mxu0 0.0
    %932 = vmatpush1.xpose.msra.mxu0 0.0
    %933 = vmatprep.subr.mxu0 0.0
    %934 = vmatpush1.xpose.msra.mxu0 0.0
    %935 = vmatprep.subr.mxu0 0.0
    %936 = vmatpush1.xpose.msra.mxu0 0.0
    %937 = vmatprep.subr.mxu0 0.0
    %938 = vmatpush1.xpose.msra.mxu0 0.0
    %939 = vmatprep.subr.mxu0 0.0
    %940 = vmatpush1.xpose.msra.mxu0 0.0
    %941 = vmatprep.subr.mxu0 0.0
    %942 = vmatpush1.xpose.msra.mxu0 0.0
    %943 = vmatprep.subr.mxu0 0.0
    %944 = vmatpush1.xpose.msra.mxu0 0.0
    %945 = vmatprep.subr.mxu0 0.0
    %946 = vmatpush1.xpose.msra.mxu0 0.0
    %947 = vmatprep.subr.mxu0 0.0
    %948 = vmatpush1.xpose.msra.mxu0 0.0
    %949 = vmatprep.subr.mxu0 0.0
    %950 = vmatpush1.xpose.msra.mxu0 0.0
    %951 = vmatprep.subr.mxu0 0.0
    %952 = vmatpush1.xpose.msra.mxu0 0.0
    %953 = vmatprep.subr.mxu0 0.0
    %954 = vmatpush1.xpose.msra.mxu0 0.0
    %v955 = vand.u32 %v54, 4294901760
    %956 = vmatprep.subr.mxu0 %v955
    %v957 = vand.u32 %v53, 4294901760
    %958 = vmatpush1.xpose.msra.mxu0 %v957
    %959 = vmatprep.subr.mxu0 0.0
    %960 = vmatpush2.xpose.msra.mxu0 0.0
    %961 = vmatprep.subr.mxu0 0.0
    %962 = vmatpush2.xpose.msra.mxu0 0.0
    %963 = vmatprep.subr.mxu0 0.0
    %964 = vmatpush2.xpose.msra.mxu0 0.0
    %965 = vmatprep.subr.mxu0 0.0
    %966 = vmatpush2.xpose.msra.mxu0 0.0
    %967 = vmatprep.subr.mxu0 0.0
    %968 = vmatpush2.xpose.msra.mxu0 0.0
    %969 = vmatprep.subr.mxu0 0.0
    %970 = vmatpush2.xpose.msra.mxu0 0.0
    %971 = vmatprep.subr.mxu0 0.0
    %972 = vmatpush2.xpose.msra.mxu0 0.0
    %973 = vmatprep.subr.mxu0 0.0
    %974 = vmatpush2.xpose.msra.mxu0 0.0
    %975 = vmatprep.subr.mxu0 0.0
    %976 = vmatpush2.xpose.msra.mxu0 0.0
    %977 = vmatprep.subr.mxu0 0.0
    %978 = vmatpush2.xpose.msra.mxu0 0.0
    %979 = vmatprep.subr.mxu0 0.0
    %980 = vmatpush2.xpose.msra.mxu0 0.0
    %981 = vmatprep.subr.mxu0 0.0
    %982 = vmatpush2.xpose.msra.mxu0 0.0
    %983 = vmatprep.subr.mxu0 0.0
    %984 = vmatpush2.xpose.msra.mxu0 0.0
    %985 = vmatprep.subr.mxu0 0.0
    %986 = vmatpush2.xpose.msra.mxu0 0.0
    %987 = vmatprep.subr.mxu0 0.0
    %988 = vmatpush2.xpose.msra.mxu0 0.0
    %989 = vmatprep.subr.mxu0 0.0
    %990 = vmatpush2.xpose.msra.mxu0 0.0
    %v991 = vand.u32 %v49, 4294901760
    %992 = vmatprep.mubr.f32.mxu0 %v991
    %v993 = vand.u32 %v48, 4294901760
    %994 = vmatmul.mubr.f32.gmra.mxu0 %v993
    %v995 = vpop.f32.mrf.mxu0
    %v996 = vadd.f32 %v922, %v995
    %v997 = vpop.f32.mrf.mxu0
    %998 = vdwg.mxu0
    %v999 = vadd.f32 %v50, %v996
    %vm1000 = vcmask 64512
    %1001 = vst.msk [vmem:[#allocation2] sm:$0xff] %vm1000, %v999
    // Predicated region
    $region22: #{tpu_custom_call.1} parent=1 // pred_check
      %p1002 = pneg %p36
    $region23: #{tpu_custom_call.1} parent=1 // pred_check_branch
      %1004 = sbr.rel (%p1002) target = $region25
    $region24: #{tpu_custom_call.1} parent=1 // pred_region
      %v1005 = vld [vmem:[#allocation2] sm:$0xff]
      %v1006 = vadd.f32 %v1005, 5.12e-06
      %v1007 = vlaneseq
      %v1008 = vand.u32 %v1007, 127
      %vm1009 = vcmp.lt.s32.totalorder %v1008, 3
      %1011 = vset.pattern.permute.xlu0 3
      %1012 = vperm.xlu0 %1011, %v1006
      %v1013 = vpop.permute.xlu0 %1012
      %v1015 = vrcp.pop %v1013
      %v1016 = vmul.f32 %v1005, %v1015
      %v1017 = vsel %vm1009, %v1016, %v1005
      %1018 = vst.msk [vmem:[#allocation8] sm:$0xff] %vm1000, %v1017
    $region25: #{tpu_custom_call.1} parent=1 // pred_fallthru
      _
    // Predicated region
    $region26: #{tpu_custom_call.1} parent=1 // pred_check
      _
    $region27: #{tpu_custom_call.1} parent=1 // pred_check_branch
      %1020 = sbr.rel (0) target = $region29
    $region28: #{tpu_custom_call.1} parent=1 // pred_region
      %s1022 = ssub.s32 128, 128
      %1023 = vsyncadd [#allocation5], %s1022
      %s1025 = sshll.u32 [#allocation8], 4
      %s1026 = int_to_ptr.vmem [resolvable:$true] %s1025
      %1028 = dma.vmem_to_hbm [thread:$0]  %s1026, 128, %s2, [#allocation5]
    $region29: #{tpu_custom_call.1} parent=1 // pred_fallthru
      _
    // Predicated region
    $region30: #{tpu_custom_call.1} parent=1 // pred_check
      _
    $region31: #{tpu_custom_call.1} parent=1 // pred_check_branch
      %1030 = sbr.rel (0) target = $region33
    $region32: #{tpu_custom_call.1} parent=1 // pred_region
      %1031 = dma.done [#allocation5], 128
    $region33: #{tpu_custom_call.1} parent=1 // pred_fallthru
      _
    %1032 = vsyncpa [#allocation4], 1
    %1033 = vsyncpa [#allocation7], 1
    %1034 = vsyncpa [#allocation5], 1

</llo_original>
